<compile_context>
chip_gen: v7x
topology: tpu7x:2x2x1
jax: 0.10.0
libtpu: 0.0.40
codegen_flags: <defaults>
</compile_context>

<pallas_src>
import functools

import jax
import jax.numpy as jnp
from jax.experimental import pallas as pl
from jax.experimental.pallas import tpu as pltpu


N_LEGAL = 10
N_COMP = 2
N_OUT_PAD = 128                         # lane-dense fused output width (>= N_LEGAL + N_COMP)
B_TILE = 8                              # f32 sublane tile for the batch axis
S_TILE_BUDGET_BYTES = 8 * 1024 * 1024   # per-buffer hidden_states tile (double-buffered)
VMEM_LIMIT_BYTES = 48 * 1024 * 1024     # explicit scoped-VMEM budget (safe on v5e/v6e/v7x)


def _round_up(x, m):
    return ((x + m - 1) // m) * m


def _choose_s_tile(S, H, itemsize):
    """Largest sublane-aligned sequence tile whose (B_TILE, s_tile, H) block fits the budget."""
    sublane = max(8, 32 // itemsize)            # 8 for f32, 16 for bf16, 32 for int8/fp8
    budget_rows = S_TILE_BUDGET_BYTES // (B_TILE * H * itemsize)
    budget_rows = max(sublane, (budget_rows // sublane) * sublane)
    return min(_round_up(S, sublane), budget_rows)


def legal_head_kernel(hs_ref, w1_ref, b1_ref, w2_ref, b2_ref,
                      out_ref, acc_ref, *, s_tile, seq_len):
    s = pl.program_id(1)
    n_s = pl.num_programs(1)

    @pl.when(s == 0)
    def _():
        acc_ref[...] = jnp.zeros_like(acc_ref)

    # --- streamed sum-pool, accumulated in f32 (fused convert+reduce) -------------
    rem = seq_len % s_tile                      # static Python int
    if rem == 0:
        acc_ref[...] += jnp.sum(hs_ref[...], axis=1, dtype=jnp.float32)
    else:
        # Ragged S tail: out-of-bounds block contents are NOT guaranteed to be zero,
        # so the last S block masks invalid rows before accumulating.
        @pl.when(s < n_s - 1)
        def _():
            acc_ref[...] += jnp.sum(hs_ref[...], axis=1, dtype=jnp.float32)

        @pl.when(s == n_s - 1)
        def _():
            pos = jax.lax.broadcasted_iota(jnp.int32, (s_tile, hs_ref.shape[-1]), 0)
            tail = jnp.where((pos < rem)[None, :, :], hs_ref[...], 0)
            acc_ref[...] += jnp.sum(tail, axis=1, dtype=jnp.float32)

    # --- fused two-head MLP epilogue on the last S step ---------------------------
    @pl.when(s == n_s - 1)
    def _():
        # 1/S is pre-folded into w1 (fuse_params), so acc is used directly.
        h = jnp.dot(acc_ref[...], w1_ref[...],
                    preferred_element_type=jnp.float32) + b1_ref[...]
        h = jnp.maximum(h, 0.0)                 # ReLU; Dropout = identity at inference
        out_ref[...] = (jnp.dot(h, w2_ref[...],
                                preferred_element_type=jnp.float32)
                        + b2_ref[...]).astype(out_ref.dtype)


def fuse_params(params, seq_len):
    """Fuse / pad the two heads' parameters ONCE at model-load time (hoisted out of the
    per-call path). Also folds the mean-pool's 1/seq_len into the first-layer weights.

    Note: casting w1/w2 here to bf16 would halve their VMEM/HBM footprint (useful on
    v7x); kept f32 to preserve the module's exact numerics.
    """
    D = params["w1a"].shape[1]
    inv_s = 1.0 / float(seq_len)
    w1 = jnp.concatenate([params["w1a"], params["w1b"]], axis=1) * inv_s  # (H, 2D), 1/S folded
    b1 = jnp.concatenate([params["b1a"], params["b1b"]], axis=1)          # (1, 2D)
    w2 = jnp.zeros((2 * D, N_OUT_PAD), params["w2a"].dtype)
    w2 = w2.at[:D, :N_LEGAL].set(params["w2a"])
    w2 = w2.at[D:, N_LEGAL:N_LEGAL + N_COMP].set(params["w2b"])           # (2D, 128) block-diag
    b2 = jnp.zeros((1, N_OUT_PAD), params["b2a"].dtype)
    b2 = b2.at[:, :N_LEGAL].set(params["b2a"])
    b2 = b2.at[:, N_LEGAL:N_LEGAL + N_COMP].set(params["b2b"])
    return {"w1": w1, "b1": b1, "w2": w2, "b2": b2,
            "seq_len": int(seq_len), "legal_dim": int(D)}


def legal_reasoning_head(hidden_states, fused, s_tile=None):
    """hidden_states: [B, S, H]. fused: output of fuse_params (precomputed at load time)."""
    B, S, H = hidden_states.shape
    assert S == fused["seq_len"], "fuse_params was built for a different sequence length"
    D = fused["legal_dim"]

    itemsize = jnp.dtype(hidden_states.dtype).itemsize
    if s_tile is None:
        s_tile = _choose_s_tile(S, H, itemsize)

    # No input padding: cdiv grids, ragged S tail masked in-kernel, ragged batch rows
    # are simply never written past the (B, N_OUT_PAD) output bounds.
    grid = (pl.cdiv(B, B_TILE), pl.cdiv(S, s_tile))
    # TODO(synk): on v7x with B <= B_TILE (a single batch tile) the "parallel" axis leaves
    # one TensorCore idle; split the S reduction across the two cores (partial pooled sums
    # combined in a tiny second stage) to recover ~2x for small-batch serving.
    kernel = functools.partial(legal_head_kernel, s_tile=s_tile, seq_len=S)

    w1, b1, w2, b2 = fused["w1"], fused["b1"], fused["w2"], fused["b2"]
    cost = pl.CostEstimate(
        flops=(B * S * H                           # pooling adds
               + 2 * B * H * (2 * D)               # fused layer-1 matmul
               + 2 * B * (2 * D) * N_OUT_PAD),     # fused layer-2 matmul
        transcendentals=0,
        bytes_accessed=(hidden_states.size * itemsize
                        + sum(int(a.size) * jnp.dtype(a.dtype).itemsize
                              for a in (w1, b1, w2, b2))
                        + B * N_OUT_PAD * 4),
    )

    # Weight/bias specs use a constant index_map so they are fetched once and stay
    # resident; at these sizes (<= a few MiB f32) default double-buffering still fits
    # comfortably under the explicit 48 MiB budget, so no custom pipeline_mode is used.
    out = pl.pallas_call(
        kernel,
        out_shape=jax.ShapeDtypeStruct((B, N_OUT_PAD), jnp.float32),
        grid=grid,
        in_specs=[
            pl.BlockSpec((B_TILE, s_tile, H), lambda b, s: (b, s, 0)),    # streamed
            pl.BlockSpec((H, 2 * D), lambda b, s: (0, 0)),                # resident weights
            pl.BlockSpec((1, 2 * D), lambda b, s: (0, 0)),
            pl.BlockSpec((2 * D, N_OUT_PAD), lambda b, s: (0, 0)),
            pl.BlockSpec((1, N_OUT_PAD), lambda b, s: (0, 0)),
        ],
        out_specs=pl.BlockSpec((B_TILE, N_OUT_PAD), lambda b, s: (b, 0)),
        scratch_shapes=[pltpu.VMEM((B_TILE, H), jnp.float32)],
        compiler_params=pltpu.CompilerParams(
            dimension_semantics=("parallel", "arbitrary"),
            vmem_limit_bytes=VMEM_LIMIT_BYTES,
        ),
        cost_estimate=cost,
    )(hidden_states, w1, b1, w2, b2)

    return {
        "legal_type_logits": out[:, :N_LEGAL],
        "compliance_logits": out[:, N_LEGAL:N_LEGAL + N_COMP],
    }


def init_params(key, hidden_size, legal_dim, n_legal=N_LEGAL, n_comp=N_COMP):
    """Deterministic synthetic parameters (shapes from LegalReasoningHead.__init__)."""
    ks = jax.random.split(key, 8)
    scale = 0.02
    return {
        # legal_classifier
        "w1a": scale * jax.random.normal(ks[0], (hidden_size, legal_dim), jnp.float32),
        "b1a": scale * jax.random.normal(ks[1], (1, legal_dim), jnp.float32),
        "w2a": scale * jax.random.normal(ks[2], (legal_dim, n_legal), jnp.float32),
        "b2a": scale * jax.random.normal(ks[3], (1, n_legal), jnp.float32),
        # compliance_checker
        "w1b": scale * jax.random.normal(ks[4], (hidden_size, legal_dim), jnp.float32),
        "b1b": scale * jax.random.normal(ks[5], (1, legal_dim), jnp.float32),
        "w2b": scale * jax.random.normal(ks[6], (legal_dim, n_comp), jnp.float32),
        "b2b": scale * jax.random.normal(ks[7], (1, n_comp), jnp.float32),
    }


def reference_forward(hidden_states, p):
    pooled = jnp.mean(hidden_states, axis=1)
    ha = jnp.maximum(pooled @ p["w1a"] + p["b1a"], 0.0)
    legal = ha @ p["w2a"] + p["b2a"]
    hb = jnp.maximum(pooled @ p["w1b"] + p["b1b"], 0.0)
    comp = hb @ p["w2b"] + p["b2b"]
    return {"legal_type_logits": legal, "compliance_logits": comp}


if __name__ == "__main__":
    key = jax.random.PRNGKey(0)
    k_x1, k_x2, k_p = jax.random.split(key, 3)

    # hidden_size=128, legal_understanding_dim=128 (scaled-down config)
    H, D = 128, 128
    params = init_params(k_p, H, D)

    # Case 1: aligned small shapes (B=2, S=8) -- single grid step, no masking needed.
    B1, S1 = 2, 8
    hs1 = jax.random.normal(k_x1, (B1, S1, H), jnp.float32)
    fused1 = fuse_params(params, S1)            # hoisted out of the per-call path
    out1 = legal_reasoning_head(hs1, fused1)
    out1 = jax.tree_util.tree_map(jax.block_until_ready, out1)
    ref1 = reference_forward(hs1, params)
    assert out1["legal_type_logits"].shape == (B1, N_LEGAL)
    assert out1["compliance_logits"].shape == (B1, N_COMP)
    assert jnp.allclose(out1["legal_type_logits"], ref1["legal_type_logits"],
                        atol=1e-5, rtol=1e-5)
    assert jnp.allclose(out1["compliance_logits"], ref1["compliance_logits"],
                        atol=1e-5, rtol=1e-5)

    # Case 2: ragged batch + ragged sequence with a forced small S tile -> multi-step
    # accumulation AND the in-kernel S-tail mask path, with no wrapper-side padding copy.
    B2, S2 = 3, 20
    hs2 = jax.random.normal(k_x2, (B2, S2, H), jnp.float32)
    fused2 = fuse_params(params, S2)
    out2 = legal_reasoning_head(hs2, fused2, s_tile=8)   # grid S steps = 3, tail rem = 4
    out2 = jax.tree_util.tree_map(jax.block_until_ready, out2)
    ref2 = reference_forward(hs2, params)
    assert out2["legal_type_logits"].shape == (B2, N_LEGAL)
    assert out2["compliance_logits"].shape == (B2, N_COMP)
    assert jnp.allclose(out2["legal_type_logits"], ref2["legal_type_logits"],
                        atol=1e-5, rtol=1e-5)
    assert jnp.allclose(out2["compliance_logits"], ref2["compliance_logits"],
                        atol=1e-5, rtol=1e-5)

    print("KERNEL_OK")
</pallas_src>

<mosaic_0001>
module attributes {stable_mosaic.version = 11 : i64} {
  func.func @legal_head_kernel(%arg0: i32, %arg1: i32, %arg2: memref<8x8x128xf32, #tpu.memory_space<vmem>>, %arg3: memref<128x256xf32, #tpu.memory_space<vmem>>, %arg4: memref<1x256xf32, #tpu.memory_space<vmem>>, %arg5: memref<256x128xf32, #tpu.memory_space<vmem>>, %arg6: memref<1x128xf32, #tpu.memory_space<vmem>>, %arg7: memref<8x128xf32, #tpu.memory_space<vmem>>, %arg8: memref<8x128xf32, #tpu.memory_space<vmem>>) attributes {dimension_semantics = [#tpu.dimension_semantics<parallel>, #tpu.dimension_semantics<arbitrary>], iteration_bounds = array<i64: 1, 1>, scalar_prefetch = 0 : i64, scratch_operands = 1 : i64, tpu.core_type = #tpu.core_type<tc>, window_params = [{transform_indices = @transform_0, window_bounds = array<i64: 8, 8, 128>}, {pipeline_mode = #tpu.pipeline_mode<synchronous>, transform_indices = @transform_1, window_bounds = array<i64: 128, 256>}, {pipeline_mode = #tpu.pipeline_mode<synchronous>, transform_indices = @transform_2, window_bounds = array<i64: 1, 256>}, {pipeline_mode = #tpu.pipeline_mode<synchronous>, transform_indices = @transform_3, window_bounds = array<i64: 256, 128>}, {pipeline_mode = #tpu.pipeline_mode<synchronous>, transform_indices = @transform_4, window_bounds = array<i64: 1, 128>}, {transform_indices = @transform_5, window_bounds = array<i64: 8, 128>}]} {
    %c0_i32 = arith.constant 0 : i32
    %0 = arith.cmpi eq, %arg1, %c0_i32 : i32
    %1 = arith.extui %0 : i1 to i32
    %c0_i32_0 = arith.constant 0 : i32
    %2 = arith.cmpi ne, %1, %c0_i32_0 : i32
    scf.if %2 {
      %cst_9 = arith.constant 0.000000e+00 : f32
      %11 = vector.broadcast %cst_9 : f32 to vector<8x128xf32>
      %c0_10 = arith.constant 0 : index
      %c0_11 = arith.constant 0 : index
      %12 = vector.load %arg8[%c0_10, %c0_11] : memref<8x128xf32, #tpu.memory_space<vmem>>, vector<8x128xf32>
      tpu.vector_store %arg8[%c0_10, %c0_11], %11 {strides = array<i32>} : memref<8x128xf32, #tpu.memory_space<vmem>>, vector<8x128xf32>,
    } else {
    }
    %c0 = arith.constant 0 : index
    %c0_1 = arith.constant 0 : index
    %3 = vector.load %arg8[%c0, %c0_1] : memref<8x128xf32, #tpu.memory_space<vmem>>, vector<8x128xf32>
    %c0_2 = arith.constant 0 : index
    %c0_3 = arith.constant 0 : index
    %c0_4 = arith.constant 0 : index
    %4 = vector.load %arg2[%c0_2, %c0_3, %c0_4] : memref<8x8x128xf32, #tpu.memory_space<vmem>>, vector<8x8x128xf32>
    %cst = arith.constant dense<0.000000e+00> : vector<8x128xf32>
    %5 = vector.multi_reduction <add>, %4, %cst [1] : vector<8x8x128xf32> to vector<8x128xf32>
    %6 = arith.addf %3, %5 : vector<8x128xf32>
    %c0_5 = arith.constant 0 : index
    %c0_6 = arith.constant 0 : index
    %7 = vector.load %arg8[%c0_5, %c0_6] : memref<8x128xf32, #tpu.memory_space<vmem>>, vector<8x128xf32>
    tpu.vector_store %arg8[%c0_5, %c0_6], %6 {strides = array<i32>} : memref<8x128xf32, #tpu.memory_space<vmem>>, vector<8x128xf32>,
    %c0_i32_7 = arith.constant 0 : i32
    %8 = arith.cmpi eq, %arg1, %c0_i32_7 : i32
    %9 = arith.extui %8 : i1 to i32
    %c0_i32_8 = arith.constant 0 : i32
    %10 = arith.cmpi ne, %9, %c0_i32_8 : i32
    scf.if %10 {
      %c0_9 = arith.constant 0 : index
      %c0_10 = arith.constant 0 : index
      %11 = vector.load %arg8[%c0_9, %c0_10] : memref<8x128xf32, #tpu.memory_space<vmem>>, vector<8x128xf32>
      %c0_11 = arith.constant 0 : index
      %c0_12 = arith.constant 0 : index
      %12 = vector.load %arg3[%c0_11, %c0_12] : memref<128x256xf32, #tpu.memory_space<vmem>>, vector<128x256xf32>
      %cst_13 = arith.constant dense<0.000000e+00> : vector<8x256xf32>
      %13 = tpu.matmul %11, %12, %cst_13 {dimension_numbers = #tpu.dot_dimension_numbers<[1], [0], [0], [1], [0, 0, 1, 1], [], []>} : vector<8x128xf32>, vector<128x256xf32>, vector<8x256xf32> -> vector<8x256xf32>
      %c0_14 = arith.constant 0 : index
      %c0_15 = arith.constant 0 : index
      %14 = vector.load %arg4[%c0_14, %c0_15] : memref<1x256xf32, #tpu.memory_space<vmem>>, vector<1x256xf32>
      %15 = vector.broadcast %14 : vector<1x256xf32> to vector<8x256xf32>
      %16 = arith.addf %13, %15 : vector<8x256xf32>
      %cst_16 = arith.constant 0.000000e+00 : f32
      %17 = vector.broadcast %cst_16 : f32 to vector<8x256xf32>
      %18 = arith.maximumf %16, %17 : vector<8x256xf32>
      %c0_17 = arith.constant 0 : index
      %c0_18 = arith.constant 0 : index
      %19 = vector.load %arg5[%c0_17, %c0_18] : memref<256x128xf32, #tpu.memory_space<vmem>>, vector<256x128xf32>
      %cst_19 = arith.constant dense<0.000000e+00> : vector<8x128xf32>
      %20 = tpu.matmul %18, %19, %cst_19 {dimension_numbers = #tpu.dot_dimension_numbers<[1], [0], [0], [1], [0, 0, 1, 1], [], []>} : vector<8x256xf32>, vector<256x128xf32>, vector<8x128xf32> -> vector<8x128xf32>
      %c0_20 = arith.constant 0 : index
      %c0_21 = arith.constant 0 : index
      %21 = vector.load %arg6[%c0_20, %c0_21] : memref<1x128xf32, #tpu.memory_space<vmem>>, vector<1x128xf32>
      %22 = vector.broadcast %21 : vector<1x128xf32> to vector<8x128xf32>
      %23 = arith.addf %20, %22 : vector<8x128xf32>
      %c0_22 = arith.constant 0 : index
      %c0_23 = arith.constant 0 : index
      %24 = vector.load %arg7[%c0_22, %c0_23] : memref<8x128xf32, #tpu.memory_space<vmem>>, vector<8x128xf32>
      tpu.vector_store %arg7[%c0_22, %c0_23], %23 {strides = array<i32>} : memref<8x128xf32, #tpu.memory_space<vmem>>, vector<8x128xf32>,
    } else {
    }
    return
  }
  func.func @transform_0(%arg0: i32, %arg1: i32) -> (i32, i32, i32) {
    %c0_i32 = arith.constant 0 : i32
    %c0_i32_0 = arith.constant 0 : i32
    return %arg0, %arg1, %c0_i32 : i32, i32, i32
  }
  func.func @transform_1(%arg0: i32, %arg1: i32) -> (i32, i32) {
    %c0_i32 = arith.constant 0 : i32
    %c0_i32_0 = arith.constant 0 : i32
    %c0_i32_1 = arith.constant 0 : i32
    return %c0_i32, %c0_i32_0 : i32, i32
  }
  func.func @transform_2(%arg0: i32, %arg1: i32) -> (i32, i32) {
    %c0_i32 = arith.constant 0 : i32
    %c0_i32_0 = arith.constant 0 : i32
    %c0_i32_1 = arith.constant 0 : i32
    return %c0_i32, %c0_i32_0 : i32, i32
  }
  func.func @transform_3(%arg0: i32, %arg1: i32) -> (i32, i32) {
    %c0_i32 = arith.constant 0 : i32
    %c0_i32_0 = arith.constant 0 : i32
    %c0_i32_1 = arith.constant 0 : i32
    return %c0_i32, %c0_i32_0 : i32, i32
  }
  func.func @transform_4(%arg0: i32, %arg1: i32) -> (i32, i32) {
    %c0_i32 = arith.constant 0 : i32
    %c0_i32_0 = arith.constant 0 : i32
    %c0_i32_1 = arith.constant 0 : i32
    return %c0_i32, %c0_i32_0 : i32, i32
  }
  func.func @transform_5(%arg0: i32, %arg1: i32) -> (i32, i32) {
    %c0_i32 = arith.constant 0 : i32
    %c0_i32_0 = arith.constant 0 : i32
    return %arg0, %c0_i32 : i32, i32
  }
}

</mosaic_0001>

<llo_original>
// kernel: tpu_custom_call.1
$region0: #{tpu_custom_call.1}
  #allocation0 [shape = 'u32[]', space=smem, size = 0x4, offset = 0x4, fixed_abs, tag = 'smem constant byte address 0x4 - core index']
  #allocation1 [shape = 'u32[144,128]{1,0:T(1,128)}', space=vmem, size = 0x12000, scoped, tag = 'internal scratch']
  #allocation2 [shape = 'f32[8,128]{1,0:T(8,128)}', space=vmem, size = 0x1000, scoped, tag = 'scratch operand']
  %s0 = inlined_call_operand.hbm [shape: f32[2,8,128], index: 0, kind: input, shape index: {}]
  %s1 = inlined_call_operand.hbm [shape: f32[128,256], index: 1, kind: input, shape index: {}]
  %s2 = inlined_call_operand.vmem [shape: f32[1,256], index: 2, kind: input, shape index: {}]
  %s3 = inlined_call_operand.hbm [shape: f32[256,128], index: 3, kind: input, shape index: {}]
  %s4 = inlined_call_operand.vmem [shape: f32[1,128], index: 4, kind: input, shape index: {}]
  %s5 = inlined_call_operand.hbm [shape: f32[2,128], index: 5, kind: output, shape index: {}]
  %s6 = sld [smem:[#allocation0]]
  $region50: #{tpu_custom_call.1} parent=0
    _
  %s8 = ssub.s32 1, %s6
  %s9 = scalar_select 0, %s8, %s6
  $region1: #{tpu_custom_call.1} parent=0
    #allocation3 [shape = 'u8[32768]{0}', space=vmem, size = 0x8000, scoped, tag = 'input window, operand 0, single buffered']
    #allocation4 [shape = 's32[1]{0}', space=sflag, size = 0x4, scoped, tag = 'scoped memory for tpu_custom_call.1']
    #allocation5 [shape = 's32[1]{0}', space=sflag, size = 0x4, scoped, tag = 'scoped memory for tpu_custom_call.1']
    #allocation6 [shape = 'u8[131072]{0}', space=vmem, size = 0x20000, scoped, tag = 'input window, operand 1, single buffered']
    #allocation7 [shape = 's32[1]{0}', space=sflag, size = 0x4, scoped, tag = 'scoped memory for tpu_custom_call.1']
    #allocation8 [shape = 'u8[131072]{0}', space=vmem, size = 0x20000, scoped, tag = 'input window, operand 3, single buffered']
    #allocation9 [shape = 'u8[4096]{0}', space=vmem, size = 0x1000, scoped, tag = 'output window, operand 0, single buffered']
    %10 = vsyncpa [#allocation4], 0
    %11 = vsyncpa [#allocation7], 0
    %12 = vsyncpa [#allocation5], 0
    // Predicated region
    $region2: #{tpu_custom_call.1} parent=1 // pred_check
      _
    $region3: #{tpu_custom_call.1} parent=1 // pred_check_branch
      %14 = sbr.rel (0) target = $region5
    $region4: #{tpu_custom_call.1} parent=1 // pred_region
      %s16 = ssub.s32 1024, 256
      %17 = vsyncadd [#allocation4], %s16
      %s18 = sshll.u32 [#allocation3], 4
      %s19 = int_to_ptr.vmem [resolvable:$true] %s18
      %24 = dma.hbm_to_vmem [thread:$0]  %s0, 256, %s19, [#allocation4], 128, 128, 8
    $region5: #{tpu_custom_call.1} parent=1 // pred_fallthru
      _
    // Predicated region
    $region6: #{tpu_custom_call.1} parent=1 // pred_check
      _
    $region7: #{tpu_custom_call.1} parent=1 // pred_check_branch
      %26 = sbr.rel (0) target = $region9
    $region8: #{tpu_custom_call.1} parent=1 // pred_region
      %s28 = ssub.s32 4096, 4096
      %29 = vsyncadd [#allocation7], %s28
      %s30 = sshll.u32 [#allocation6], 4
      %s31 = int_to_ptr.vmem [resolvable:$true] %s30
      %36 = dma.hbm_to_vmem [thread:$0]  %s1, 4096, %s31, [#allocation7], 256, 256, 16
    $region9: #{tpu_custom_call.1} parent=1 // pred_fallthru
      _
    // Predicated region
    $region10: #{tpu_custom_call.1} parent=1 // pred_check
      _
    $region11: #{tpu_custom_call.1} parent=1 // pred_check_branch
      %38 = sbr.rel (0) target = $region13
    $region12: #{tpu_custom_call.1} parent=1 // pred_region
      _
    $region13: #{tpu_custom_call.1} parent=1 // pred_fallthru
      _
    // Predicated region
    $region14: #{tpu_custom_call.1} parent=1 // pred_check
      _
    $region15: #{tpu_custom_call.1} parent=1 // pred_check_branch
      %40 = sbr.rel (0) target = $region17
    $region16: #{tpu_custom_call.1} parent=1 // pred_region
      %s42 = ssub.s32 4096, 4096
      %43 = vsyncadd [#allocation7], %s42
      %s44 = sshll.u32 [#allocation8], 4
      %s45 = int_to_ptr.vmem [resolvable:$true] %s44
      %50 = dma.hbm_to_vmem [thread:$0]  %s3, 4096, %s45, [#allocation7], 128, 128, 8
    $region17: #{tpu_custom_call.1} parent=1 // pred_fallthru
      _
    // Predicated region
    $region18: #{tpu_custom_call.1} parent=1 // pred_check
      _
    $region19: #{tpu_custom_call.1} parent=1 // pred_check_branch
      %52 = sbr.rel (0) target = $region21
    $region20: #{tpu_custom_call.1} parent=1 // pred_region
      _
    $region21: #{tpu_custom_call.1} parent=1 // pred_fallthru
      _
    // Predicated region
    $region22: #{tpu_custom_call.1} parent=1 // pred_check
      _
    $region23: #{tpu_custom_call.1} parent=1 // pred_check_branch
      %54 = sbr.rel (0) target = $region25
    $region24: #{tpu_custom_call.1} parent=1 // pred_region
      %55 = dma.done [#allocation4], 1024
    $region25: #{tpu_custom_call.1} parent=1 // pred_fallthru
      _
    // Predicated region
    $region26: #{tpu_custom_call.1} parent=1 // pred_check
      _
    $region27: #{tpu_custom_call.1} parent=1 // pred_check_branch
      %57 = sbr.rel (0) target = $region29
    $region28: #{tpu_custom_call.1} parent=1 // pred_region
      %58 = dma.done [#allocation7], 4096
    $region29: #{tpu_custom_call.1} parent=1 // pred_fallthru
      _
    // Predicated region
    $region30: #{tpu_custom_call.1} parent=1 // pred_check
      _
    $region31: #{tpu_custom_call.1} parent=1 // pred_check_branch
      %60 = sbr.rel (0) target = $region33
    $region32: #{tpu_custom_call.1} parent=1 // pred_region
      %61 = dma.done [#allocation7], 4096
    $region33: #{tpu_custom_call.1} parent=1 // pred_fallthru
      _
    %p62 = scmp.eq.s32.totalorder 0, 0
    // Predicated region
    $region34: #{tpu_custom_call.1} parent=1 // pred_check
      %p63 = pneg %p62
    $region35: #{tpu_custom_call.1} parent=1 // pred_check_branch
      %65 = sbr.rel (%p63) target = $region37
    $region36: #{tpu_custom_call.1} parent=1 // pred_region
      %66 = vst [vmem:[#allocation2] sm:$0xff] 0.0
    $region37: #{tpu_custom_call.1} parent=1 // pred_fallthru
      _
    %v67 = vld [vmem:[#allocation2] sm:$0xff]
    %v68 = vld [vmem:[#allocation3] sm:$0xff]
    %v69 = vld [vmem:[#allocation3 + $0x8] sm:$0xff]
    %v70 = vld [vmem:[#allocation3 + $0x10] sm:$0xff]
    %v71 = vld [vmem:[#allocation3 + $0x18] sm:$0xff]
    %v72 = vld [vmem:[#allocation3 + $0x20] sm:$0xff]
    %v73 = vld [vmem:[#allocation3 + $0x28] sm:$0xff]
    %v74 = vld [vmem:[#allocation3 + $0x30] sm:$0xff]
    %v75 = vld [vmem:[#allocation3 + $0x38] sm:$0xff]
    %v76 = vrot.slane %v68, 4
    %v77 = vadd.f32 %v68, %v76
    %v78 = vrot.slane %v77, 2
    %v79 = vadd.f32 %v77, %v78
    %v80 = vrot.slane %v79, 1
    %v81 = vadd.f32 %v79, %v80
    %v82 = vrot.slane %v69, 4
    %v83 = vadd.f32 %v69, %v82
    %v84 = vrot.slane %v83, 2
    %v85 = vadd.f32 %v83, %v84
    %v86 = vrot.slane %v85, 1
    %v87 = vadd.f32 %v85, %v86
    %v88 = vrot.slane %v70, 4
    %v89 = vadd.f32 %v70, %v88
    %v90 = vrot.slane %v89, 2
    %v91 = vadd.f32 %v89, %v90
    %v92 = vrot.slane %v91, 1
    %v93 = vadd.f32 %v91, %v92
    %v94 = vrot.slane %v71, 4
    %v95 = vadd.f32 %v71, %v94
    %v96 = vrot.slane %v95, 2
    %v97 = vadd.f32 %v95, %v96
    %v98 = vrot.slane %v97, 1
    %v99 = vadd.f32 %v97, %v98
    %v100 = vrot.slane %v72, 4
    %v101 = vadd.f32 %v72, %v100
    %v102 = vrot.slane %v101, 2
    %v103 = vadd.f32 %v101, %v102
    %v104 = vrot.slane %v103, 1
    %v105 = vadd.f32 %v103, %v104
    %v106 = vrot.slane %v73, 4
    %v107 = vadd.f32 %v73, %v106
    %v108 = vrot.slane %v107, 2
    %v109 = vadd.f32 %v107, %v108
    %v110 = vrot.slane %v109, 1
    %v111 = vadd.f32 %v109, %v110
    %v112 = vrot.slane %v74, 4
    %v113 = vadd.f32 %v74, %v112
    %v114 = vrot.slane %v113, 2
    %v115 = vadd.f32 %v113, %v114
    %v116 = vrot.slane %v115, 1
    %v117 = vadd.f32 %v115, %v116
    %v118 = vrot.slane %v75, 4
    %v119 = vadd.f32 %v75, %v118
    %v120 = vrot.slane %v119, 2
    %v121 = vadd.f32 %v119, %v120
    %v122 = vrot.slane %v121, 1
    %v123 = vadd.f32 %v121, %v122
    %vm132 = vcmask 1041409
    %v133 = vsel %vm132, %v87, %v81
    %vm134 = vcmask 1042434
    %v135 = vsel %vm134, %v93, %v133
    %vm136 = vcmask 1043459
    %v137 = vsel %vm136, %v99, %v135
    %vm138 = vcmask 1044484
    %v139 = vsel %vm138, %v105, %v137
    %vm140 = vcmask 1045509
    %v141 = vsel %vm140, %v111, %v139
    %vm142 = vcmask 1046534
    %v143 = vsel %vm142, %v117, %v141
    %vm144 = vcmask 1047559
    %v145 = vsel %vm144, %v123, %v143
    %v147 = vadd.f32 %v67, %v145
    %148 = vst [vmem:[#allocation2] sm:$0xff] %v147
    // Predicated region
    $region38: #{tpu_custom_call.1} parent=1 // pred_check
      %p149 = pneg %p62
    $region39: #{tpu_custom_call.1} parent=1 // pred_check_branch
      %151 = sbr.rel (%p149) target = $region41
    $region40: #{tpu_custom_call.1} parent=1 // pred_region
      %v152 = vld [vmem:[#allocation2] sm:$0xff]
      %v153 = vld [vmem:[#allocation6] sm:$0xff]
      %v154 = vld [vmem:[#allocation6 + $0x8] sm:$0xff]
      %v155 = vld [vmem:[#allocation6 + $0x10] sm:$0xff]
      %v156 = vld [vmem:[#allocation6 + $0x18] sm:$0xff]
      %v157 = vld [vmem:[#allocation6 + $0x20] sm:$0xff]
      %v158 = vld [vmem:[#allocation6 + $0x28] sm:$0xff]
      %v159 = vld [vmem:[#allocation6 + $0x30] sm:$0xff]
      %v160 = vld [vmem:[#allocation6 + $0x38] sm:$0xff]
      %v161 = vld [vmem:[#allocation6 + $0x40] sm:$0xff]
      %v162 = vld [vmem:[#allocation6 + $0x48] sm:$0xff]
      %v163 = vld [vmem:[#allocation6 + $0x50] sm:$0xff]
      %v164 = vld [vmem:[#allocation6 + $0x58] sm:$0xff]
      %v165 = vld [vmem:[#allocation6 + $0x60] sm:$0xff]
      %v166 = vld [vmem:[#allocation6 + $0x68] sm:$0xff]
      %v167 = vld [vmem:[#allocation6 + $0x70] sm:$0xff]
      %v168 = vld [vmem:[#allocation6 + $0x78] sm:$0xff]
      %v169 = vld [vmem:[#allocation6 + $0x80] sm:$0xff]
      %v170 = vld [vmem:[#allocation6 + $0x88] sm:$0xff]
      %v171 = vld [vmem:[#allocation6 + $0x90] sm:$0xff]
      %v172 = vld [vmem:[#allocation6 + $0x98] sm:$0xff]
      %v173 = vld [vmem:[#allocation6 + $0xa0] sm:$0xff]
      %v174 = vld [vmem:[#allocation6 + $0xa8] sm:$0xff]
      %v175 = vld [vmem:[#allocation6 + $0xb0] sm:$0xff]
      %v176 = vld [vmem:[#allocation6 + $0xb8] sm:$0xff]
      %v177 = vld [vmem:[#allocation6 + $0xc0] sm:$0xff]
      %v178 = vld [vmem:[#allocation6 + $0xc8] sm:$0xff]
      %v179 = vld [vmem:[#allocation6 + $0xd0] sm:$0xff]
      %v180 = vld [vmem:[#allocation6 + $0xd8] sm:$0xff]
      %v181 = vld [vmem:[#allocation6 + $0xe0] sm:$0xff]
      %v182 = vld [vmem:[#allocation6 + $0xe8] sm:$0xff]
      %v183 = vld [vmem:[#allocation6 + $0xf0] sm:$0xff]
      %v184 = vld [vmem:[#allocation6 + $0xf8] sm:$0xff]
      %v185 = vld [vmem:[%s2] sm:$0x3]
      %v187 = vlaneseq
      %v188 = vshrl.u32 %v187, 7
      %v189 = vsub.s32 0, %v188
      %v190 = vrot.slane %v185, %v189
      %v191 = vlaneseq
      %v192 = vshrl.u32 %v191, 7
      %v193 = vsub.s32 1, %v192
      %v194 = vrot.slane %v185, %v193
      %197 = vmatprep.subr.mxu0 %v154
      %198 = vmatpush1.msra.mxu0 %v153
      %199 = vmatprep.subr.mxu0 %v156
      %200 = vmatpush1.msra.mxu0 %v155
      %201 = vmatprep.subr.mxu0 %v158
      %202 = vmatpush1.msra.mxu0 %v157
      %203 = vmatprep.subr.mxu0 %v160
      %204 = vmatpush1.msra.mxu0 %v159
      %205 = vmatprep.subr.mxu0 %v162
      %206 = vmatpush1.msra.mxu0 %v161
      %207 = vmatprep.subr.mxu0 %v164
      %208 = vmatpush1.msra.mxu0 %v163
      %209 = vmatprep.subr.mxu0 %v166
      %210 = vmatpush1.msra.mxu0 %v165
      %211 = vmatprep.subr.mxu0 %v168
      %212 = vmatpush1.msra.mxu0 %v167
      %213 = vmatprep.subr.mxu0 %v170
      %214 = vmatpush1.msra.mxu0 %v169
      %215 = vmatprep.subr.mxu0 %v172
      %216 = vmatpush1.msra.mxu0 %v171
      %217 = vmatprep.subr.mxu0 %v174
      %218 = vmatpush1.msra.mxu0 %v173
      %219 = vmatprep.subr.mxu0 %v176
      %220 = vmatpush1.msra.mxu0 %v175
      %221 = vmatprep.subr.mxu0 %v178
      %222 = vmatpush1.msra.mxu0 %v177
      %223 = vmatprep.subr.mxu0 %v180
      %224 = vmatpush1.msra.mxu0 %v179
      %225 = vmatprep.subr.mxu0 %v182
      %226 = vmatpush1.msra.mxu0 %v181
      %227 = vmatprep.subr.mxu0 %v184
      %228 = vmatpush1.msra.mxu0 %v183
      %229 = vmatprep.subr.mxu0 0.0
      %230 = vmatpush1.msra.mxu0 0.0
      %231 = vmatprep.subr.mxu0 0.0
      %232 = vmatpush1.msra.mxu0 0.0
      %233 = vmatprep.subr.mxu0 0.0
      %234 = vmatpush1.msra.mxu0 0.0
      %235 = vmatprep.subr.mxu0 0.0
      %236 = vmatpush1.msra.mxu0 0.0
      %237 = vmatprep.subr.mxu0 0.0
      %238 = vmatpush1.msra.mxu0 0.0
      %239 = vmatprep.subr.mxu0 0.0
      %240 = vmatpush1.msra.mxu0 0.0
      %241 = vmatprep.subr.mxu0 0.0
      %242 = vmatpush1.msra.mxu0 0.0
      %243 = vmatprep.subr.mxu0 0.0
      %244 = vmatpush1.msra.mxu0 0.0
      %245 = vmatprep.subr.mxu0 0.0
      %246 = vmatpush1.msra.mxu0 0.0
      %247 = vmatprep.subr.mxu0 0.0
      %248 = vmatpush1.msra.mxu0 0.0
      %249 = vmatprep.subr.mxu0 0.0
      %250 = vmatpush1.msra.mxu0 0.0
      %251 = vmatprep.subr.mxu0 0.0
      %252 = vmatpush1.msra.mxu0 0.0
      %253 = vmatprep.subr.mxu0 0.0
      %254 = vmatpush1.msra.mxu0 0.0
      %255 = vmatprep.subr.mxu0 0.0
      %256 = vmatpush1.msra.mxu0 0.0
      %257 = vmatprep.subr.mxu0 0.0
      %258 = vmatpush1.msra.mxu0 0.0
      %259 = vmatprep.subr.mxu0 0.0
      %260 = vmatpush1.msra.mxu0 0.0
      %261 = vmatprep.mubr.f32.mxu0 0.0
      %262 = vmatmul.mubr.f32.gmra.mrb[0].mxu0 %v152
      %v263 = vpop.f32.mrb[0].mxu0
      %v264 = vadd.f32 %v190, %v263
      %v265 = vpop.f32.mrb[0].mxu0
      %v266 = vadd.f32 %v194, %v265
      %267 = vdwg.mxu0
      %v268 = vmax.f32 %v264, 0.0
      %v269 = vmax.f32 %v266, 0.0
      %v270 = vld [vmem:[#allocation8] sm:$0xff]
      %v271 = vld [vmem:[#allocation8 + $0x8] sm:$0xff]
      %v272 = vld [vmem:[#allocation8 + $0x10] sm:$0xff]
      %v273 = vld [vmem:[#allocation8 + $0x18] sm:$0xff]
      %v274 = vld [vmem:[#allocation8 + $0x20] sm:$0xff]
      %v275 = vld [vmem:[#allocation8 + $0x28] sm:$0xff]
      %v276 = vld [vmem:[#allocation8 + $0x30] sm:$0xff]
      %v277 = vld [vmem:[#allocation8 + $0x38] sm:$0xff]
      %v278 = vld [vmem:[#allocation8 + $0x40] sm:$0xff]
      %v279 = vld [vmem:[#allocation8 + $0x48] sm:$0xff]
      %v280 = vld [vmem:[#allocation8 + $0x50] sm:$0xff]
      %v281 = vld [vmem:[#allocation8 + $0x58] sm:$0xff]
      %v282 = vld [vmem:[#allocation8 + $0x60] sm:$0xff]
      %v283 = vld [vmem:[#allocation8 + $0x68] sm:$0xff]
      %v284 = vld [vmem:[#allocation8 + $0x70] sm:$0xff]
      %v285 = vld [vmem:[#allocation8 + $0x78] sm:$0xff]
      %v286 = vld [vmem:[#allocation8 + $0x80] sm:$0xff]
      %v287 = vld [vmem:[#allocation8 + $0x88] sm:$0xff]
      %v288 = vld [vmem:[#allocation8 + $0x90] sm:$0xff]
      %v289 = vld [vmem:[#allocation8 + $0x98] sm:$0xff]
      %v290 = vld [vmem:[#allocation8 + $0xa0] sm:$0xff]
      %v291 = vld [vmem:[#allocation8 + $0xa8] sm:$0xff]
      %v292 = vld [vmem:[#allocation8 + $0xb0] sm:$0xff]
      %v293 = vld [vmem:[#allocation8 + $0xb8] sm:$0xff]
      %v294 = vld [vmem:[#allocation8 + $0xc0] sm:$0xff]
      %v295 = vld [vmem:[#allocation8 + $0xc8] sm:$0xff]
      %v296 = vld [vmem:[#allocation8 + $0xd0] sm:$0xff]
      %v297 = vld [vmem:[#allocation8 + $0xd8] sm:$0xff]
      %v298 = vld [vmem:[#allocation8 + $0xe0] sm:$0xff]
      %v299 = vld [vmem:[#allocation8 + $0xe8] sm:$0xff]
      %v300 = vld [vmem:[#allocation8 + $0xf0] sm:$0xff]
      %v301 = vld [vmem:[#allocation8 + $0xf8] sm:$0xff]
      %v302 = vld [vmem:[%s4] sm:$0x1]
      %v304 = vlaneseq
      %v305 = vshrl.u32 %v304, 7
      %v306 = vsub.s32 0, %v305
      %v307 = vrot.slane %v302, %v306
      %309 = vmatprep.subr.mxu0 0.0
      %310 = vmatpush1.msra.mxu0 %v270
      %311 = vmatprep.subr.mxu0 0.0
      %312 = vmatpush1.msra.mxu0 %v271
      %313 = vmatprep.subr.mxu0 0.0
      %314 = vmatpush1.msra.mxu0 %v272
      %315 = vmatprep.subr.mxu0 0.0
      %316 = vmatpush1.msra.mxu0 %v273
      %317 = vmatprep.subr.mxu0 0.0
      %318 = vmatpush1.msra.mxu0 %v274
      %319 = vmatprep.subr.mxu0 0.0
      %320 = vmatpush1.msra.mxu0 %v275
      %321 = vmatprep.subr.mxu0 0.0
      %322 = vmatpush1.msra.mxu0 %v276
      %323 = vmatprep.subr.mxu0 0.0
      %324 = vmatpush1.msra.mxu0 %v277
      %325 = vmatprep.subr.mxu0 0.0
      %326 = vmatpush1.msra.mxu0 %v278
      %327 = vmatprep.subr.mxu0 0.0
      %328 = vmatpush1.msra.mxu0 %v279
      %329 = vmatprep.subr.mxu0 0.0
      %330 = vmatpush1.msra.mxu0 %v280
      %331 = vmatprep.subr.mxu0 0.0
      %332 = vmatpush1.msra.mxu0 %v281
      %333 = vmatprep.subr.mxu0 0.0
      %334 = vmatpush1.msra.mxu0 %v282
      %335 = vmatprep.subr.mxu0 0.0
      %336 = vmatpush1.msra.mxu0 %v283
      %337 = vmatprep.subr.mxu0 0.0
      %338 = vmatpush1.msra.mxu0 %v284
      %339 = vmatprep.subr.mxu0 0.0
      %340 = vmatpush1.msra.mxu0 %v285
      %341 = vmatprep.subr.mxu0 0.0
      %342 = vmatpush1.msra.mxu0 %v286
      %343 = vmatprep.subr.mxu0 0.0
      %344 = vmatpush1.msra.mxu0 %v287
      %345 = vmatprep.subr.mxu0 0.0
      %346 = vmatpush1.msra.mxu0 %v288
      %347 = vmatprep.subr.mxu0 0.0
      %348 = vmatpush1.msra.mxu0 %v289
      %349 = vmatprep.subr.mxu0 0.0
      %350 = vmatpush1.msra.mxu0 %v290
      %351 = vmatprep.subr.mxu0 0.0
      %352 = vmatpush1.msra.mxu0 %v291
      %353 = vmatprep.subr.mxu0 0.0
      %354 = vmatpush1.msra.mxu0 %v292
      %355 = vmatprep.subr.mxu0 0.0
      %356 = vmatpush1.msra.mxu0 %v293
      %357 = vmatprep.subr.mxu0 0.0
      %358 = vmatpush1.msra.mxu0 %v294
      %359 = vmatprep.subr.mxu0 0.0
      %360 = vmatpush1.msra.mxu0 %v295
      %361 = vmatprep.subr.mxu0 0.0
      %362 = vmatpush1.msra.mxu0 %v296
      %363 = vmatprep.subr.mxu0 0.0
      %364 = vmatpush1.msra.mxu0 %v297
      %365 = vmatprep.subr.mxu0 0.0
      %366 = vmatpush1.msra.mxu0 %v298
      %367 = vmatprep.subr.mxu0 0.0
      %368 = vmatpush1.msra.mxu0 %v299
      %369 = vmatprep.subr.mxu0 0.0
      %370 = vmatpush1.msra.mxu0 %v300
      %371 = vmatprep.subr.mxu0 0.0
      %372 = vmatpush1.msra.mxu0 %v301
      %373 = vmatprep.mubr.f32.mxu0 %v269
      %374 = vmatmul.mubr.f32.gmra.mrb[0].mxu0 %v268
      %v375 = vpop.f32.mrb[0].mxu0
      %v376 = vadd.f32 %v307, %v375
      %v377 = vpop.f32.mrb[0].mxu0
      %378 = vdwg.mxu0
      %379 = vst [vmem:[#allocation9] sm:$0xff] %v376
    $region41: #{tpu_custom_call.1} parent=1 // pred_fallthru
      _
    // Predicated region
    $region42: #{tpu_custom_call.1} parent=1 // pred_check
      _
    $region43: #{tpu_custom_call.1} parent=1 // pred_check_branch
      %381 = sbr.rel (0) target = $region45
    $region44: #{tpu_custom_call.1} parent=1 // pred_region
      %s383 = ssub.s32 128, 32
      %384 = vsyncadd [#allocation5], %s383
      %s385 = sshll.u32 [#allocation9], 4
      %s386 = int_to_ptr.vmem [resolvable:$true] %s385
      %391 = dma.vmem_to_hbm [thread:$0]  %s386, 32, %s5, [#allocation5], 32, 32, 2
    $region45: #{tpu_custom_call.1} parent=1 // pred_fallthru
      _
    // Predicated region
    $region46: #{tpu_custom_call.1} parent=1 // pred_check
      _
    $region47: #{tpu_custom_call.1} parent=1 // pred_check_branch
      %393 = sbr.rel (0) target = $region49
    $region48: #{tpu_custom_call.1} parent=1 // pred_region
      %394 = dma.done [#allocation5], 128
    $region49: #{tpu_custom_call.1} parent=1 // pred_fallthru
      _
    %395 = vsyncpa [#allocation4], 1
    %396 = vsyncpa [#allocation7], 1
    %397 = vsyncpa [#allocation5], 1

</llo_original>
